<compile_context>
chip_gen: v5e
topology: v5e:2x2
jax: 0.10.0
libtpu: 0.0.40
codegen_flags: <defaults>
</compile_context>

<pallas_src>
import functools

import jax
import jax.numpy as jnp
from jax.experimental import pallas as pl
from jax.experimental.pallas import tpu as pltpu

LRELU_SLOPE = 0.01
BN_EPS = 1e-5


def _round_up(x, m):
    return ((x + m - 1) // m) * m


def _cdiv(a, b):
    return (a + b - 1) // b


# ---------------- Fused single-tile kernel (fast path, num_tiles == 1) -------
def _fused_kernel(p_ref, w_ref, o_ref, *, m_true):
    # One MXU matmul does the whole complex convolution (+ bias row).
    y = jnp.dot(p_ref[...], w_ref[...], preferred_element_type=jnp.float32)
    # Zero-padded M rows of p are all-zero (including the ones/bias column),
    # so they contribute exactly 0 to both sums; divide by the true row count.
    s = jnp.sum(y, axis=0, keepdims=True)          # (1, Np)
    ss = jnp.sum(y * y, axis=0, keepdims=True)     # (1, Np)
    mean = s * (1.0 / m_true)
    var = jnp.maximum(ss * (1.0 / m_true) - mean * mean, 0.0)
    rstd = jax.lax.rsqrt(var + BN_EPS)
    z = (y - mean) * rstd
    o_ref[...] = jnp.where(z >= 0, z, LRELU_SLOPE * z)   # LeakyReLU(0.01)


# ---------------- Pass 1: matmul + per-tile BN partial stats (no y output) ---
def _stats_kernel(p_ref, w_ref, stats_ref):
    y = jnp.dot(p_ref[...], w_ref[...], preferred_element_type=jnp.float32)
    s = jnp.sum(y, axis=0, keepdims=True)          # (1, Np)
    ss = jnp.sum(y * y, axis=0, keepdims=True)     # (1, Np)
    stats_ref[...] = jnp.concatenate([s, ss], axis=0)[None]   # (1, 2, Np)


# ---------------- Pass 2: recompute matmul + BN normalize + LeakyReLU --------
def _bn_act_kernel(p_ref, w_ref, scale_ref, shift_ref, o_ref):
    y = jnp.dot(p_ref[...], w_ref[...], preferred_element_type=jnp.float32)
    z = y * scale_ref[...] + shift_ref[...]
    o_ref[...] = jnp.where(z >= 0, z, LRELU_SLOPE * z)


# ---------------- Wrapper helpers --------------------------------------------
def _im2col(x, kh, kw, sh, sw):
    """x: (N, C, H, W) -> (N*Ho*Wo, C*kh*kw) patches (VALID padding)."""
    N, C, H, W = x.shape
    Ho = (H - kh) // sh + 1
    Wo = (W - kw) // sw + 1
    idx_h = (jnp.arange(Ho) * sh)[:, None] + jnp.arange(kh)[None, :]   # (Ho, kh)
    idx_w = (jnp.arange(Wo) * sw)[:, None] + jnp.arange(kw)[None, :]   # (Wo, kw)
    p = x[:, :, idx_h[:, :, None, None], idx_w[None, None, :, :]]      # (N,C,Ho,kh,Wo,kw)
    p = jnp.transpose(p, (0, 2, 4, 1, 3, 5))                           # (N,Ho,Wo,C,kh,kw)
    return p.reshape(N * Ho * Wo, C * kh * kw), Ho, Wo


def _choose_tiles(m, target=1024):
    """Balanced M-tiles: same target on all generations (footprint ~1.5 MiB)."""
    m8 = _round_up(max(m, 1), 8)
    if m8 <= target:
        return m8, 1
    num_tiles = _cdiv(m, target)
    if num_tiles % 2:                 # keep both v7x TensorCores busy
        num_tiles += 1
    tm = _round_up(_cdiv(m, num_tiles), 8)
    return tm, num_tiles


def encoder_forward(x, params, filter_size=(7, 5), stride_size=(2, 2)):
    """x: (N, C_in, H, W, 2) f32 -> (N, C_out, Ho, Wo, 2) f32."""
    kh, kw = filter_size
    sh, sw = stride_size
    wr, wi, br, bi = params
    c_out = wr.shape[0]
    n = x.shape[0]

    # bf16 BEFORE im2col: the ~kh*kw/(sh*sw) patch blow-up is materialized at
    # 2 B/elem (numerically identical to casting the patches afterwards).
    xb = x.astype(jnp.bfloat16)
    pr, ho, wo = _im2col(xb[..., 0], kh, kw, sh, sw)   # (M, K) bf16
    pi, _, _ = _im2col(xb[..., 1], kh, kw, sh, sw)
    m, k = pr.shape

    # Pack 4 real matmuls + bias into 1:
    #   P  = [pr | pi | 1]                       (M, 2K+1)
    #   Wc = [[ wr,  wi], [-wi,  wr], [br-bi, br+bi]]   (2K+1, 2Cout)
    #   P @ Wc = [c_real | c_im]
    wr2 = wr.reshape(c_out, k).T                       # (K, Cout)
    wi2 = wi.reshape(c_out, k).T
    bias_row = jnp.concatenate([br - bi, br + bi])[None, :]           # (1, 2Cout)
    w_packed = jnp.concatenate(
        [jnp.concatenate([wr2, wi2], axis=1),
         jnp.concatenate([-wi2, wr2], axis=1),
         bias_row], axis=0)                                           # (2K+1, 2Cout)
    ones_col = jnp.ones((m, 1), jnp.bfloat16)
    p_packed = jnp.concatenate([pr, pi, ones_col], axis=1)            # (M, 2K+1)

    kc = 2 * k + 1
    nc = 2 * c_out
    kp = _round_up(kc, 128)
    np_ = _round_up(nc, 128)
    tm, num_tiles = _choose_tiles(m)
    m_pad = tm * num_tiles

    p_pad = jnp.pad(p_packed, ((0, m_pad - m), (0, kp - kc)))
    w_pad = jnp.pad(w_packed, ((0, kp - kc), (0, np_ - nc))).astype(jnp.bfloat16)

    if num_tiles == 1:
        # --- Fast path: single kernel, no intermediates, no extra launches ----
        out = pl.pallas_call(
            functools.partial(_fused_kernel, m_true=float(m)),
            out_shape=jax.ShapeDtypeStruct((m_pad, np_), jnp.float32),
            grid_spec=pltpu.PrefetchScalarGridSpec(
                num_scalar_prefetch=0,
                grid=(1,),
                in_specs=[pl.BlockSpec((tm, kp), lambda i: (0, 0)),
                          pl.BlockSpec((kp, np_), lambda i: (0, 0))],
                out_specs=pl.BlockSpec((tm, np_), lambda i: (0, 0))),
            compiler_params=pltpu.CompilerParams(
                dimension_semantics=("arbitrary",)),
        )(p_pad, w_pad)
    else:
        # --- Pass 1: per-tile sum / sumsq only (no f32 y written to HBM) ------
        stats = pl.pallas_call(
            _stats_kernel,
            out_shape=jax.ShapeDtypeStruct((num_tiles, 2, np_), jnp.float32),
            grid_spec=pltpu.PrefetchScalarGridSpec(
                num_scalar_prefetch=0,
                grid=(num_tiles,),
                in_specs=[pl.BlockSpec((tm, kp), lambda i: (i, 0)),
                          pl.BlockSpec((kp, np_), lambda i: (0, 0))],
                out_specs=pl.BlockSpec((1, 2, np_), lambda i: (i, 0, 0))),
            compiler_params=pltpu.CompilerParams(
                dimension_semantics=("parallel",)),
        )(p_pad, w_pad)

        # Tiny cross-tile reduction for BatchNorm statistics (true M rows).
        tot = stats.sum(axis=0)                        # (2, Np)
        mean = tot[0] / m
        var = jnp.maximum(tot[1] / m - mean * mean, 0.0)   # biased variance
        rstd = jax.lax.rsqrt(var + BN_EPS)
        scale = rstd.reshape(1, np_)
        shift = (-mean * rstd).reshape(1, np_)

        # --- Pass 2: recompute matmul (MXU idle anyway) + normalize + act -----
        out = pl.pallas_call(
            _bn_act_kernel,
            out_shape=jax.ShapeDtypeStruct((m_pad, np_), jnp.float32),
            grid_spec=pltpu.PrefetchScalarGridSpec(
                num_scalar_prefetch=0,
                grid=(num_tiles,),
                in_specs=[pl.BlockSpec((tm, kp), lambda i: (i, 0)),
                          pl.BlockSpec((kp, np_), lambda i: (0, 0)),
                          pl.BlockSpec((1, np_), lambda i: (0, 0)),
                          pl.BlockSpec((1, np_), lambda i: (0, 0))],
                out_specs=pl.BlockSpec((tm, np_), lambda i: (i, 0))),
            compiler_params=pltpu.CompilerParams(
                dimension_semantics=("parallel",)),
        )(p_pad, w_pad, scale, shift)

    # Strip padding, split packed real/imag, restore (N, Cout, Ho, Wo, 2)
    # to match the PyTorch module's output layout.
    out = out[:m, :nc]
    o_real = jnp.transpose(out[:, :c_out].reshape(n, ho, wo, c_out), (0, 3, 1, 2))
    o_im = jnp.transpose(out[:, c_out:].reshape(n, ho, wo, c_out), (0, 3, 1, 2))
    return jnp.stack([o_real, o_im], axis=-1)


def init_params(key, in_channels=1, out_channels=45, filter_size=(7, 5)):
    kh, kw = filter_size
    k1, k2, k3, k4 = jax.random.split(key, 4)
    fan_in = in_channels * kh * kw
    fan_out = out_channels * kh * kw
    limit = (6.0 / (fan_in + fan_out)) ** 0.5        # xavier_uniform_
    wr = jax.random.uniform(k1, (out_channels, in_channels, kh, kw),
                            jnp.float32, -limit, limit)
    wi = jax.random.uniform(k2, (out_channels, in_channels, kh, kw),
                            jnp.float32, -limit, limit)
    b_lim = 1.0 / (fan_in ** 0.5)                    # PyTorch Conv2d bias init
    br = jax.random.uniform(k3, (out_channels,), jnp.float32, -b_lim, b_lim)
    bi = jax.random.uniform(k4, (out_channels,), jnp.float32, -b_lim, b_lim)
    return wr, wi, br, bi


def _reference_forward(x, params, filter_size=(7, 5), stride_size=(2, 2)):
    """Pure-JAX f32 reference matching the PyTorch module (training-mode BN)."""
    kh, kw = filter_size
    sh, sw = stride_size
    wr, wi, br, bi = params
    c_out = wr.shape[0]
    n = x.shape[0]
    pr, ho, wo = _im2col(x[..., 0], kh, kw, sh, sw)
    pi, _, _ = _im2col(x[..., 1], kh, kw, sh, sw)
    m, k = pr.shape
    wr2 = wr.reshape(c_out, k).T
    wi2 = wi.reshape(c_out, k).T
    c_real = (pr @ wr2 + br) - (pi @ wi2 + bi)
    c_im = (pr @ wi2 + bi) + (pi @ wr2 + br)

    def bn(y):
        mean = y.mean(0, keepdims=True)
        var = ((y - mean) ** 2).mean(0, keepdims=True)
        return (y - mean) * jax.lax.rsqrt(var + BN_EPS)

    def lrelu(y):
        return jnp.where(y >= 0, y, LRELU_SLOPE * y)

    o_real = lrelu(bn(c_real))
    o_im = lrelu(bn(c_im))
    o_real = jnp.transpose(o_real.reshape(n, ho, wo, c_out), (0, 3, 1, 2))
    o_im = jnp.transpose(o_im.reshape(n, ho, wo, c_out), (0, 3, 1, 2))
    return jnp.stack([o_real, o_im], axis=-1)


if __name__ == "__main__":
    key = jax.random.PRNGKey(0)
    k_x, k_p, k_x2 = jax.random.split(key, 3)

    # Encoder defaults: filter (7,5), stride (2,2), in=1, out=45, padding (0,0)
    params = init_params(k_p, in_channels=1, out_channels=45, filter_size=(7, 5))
    fwd = jax.jit(functools.partial(encoder_forward,
                                    filter_size=(7, 5), stride_size=(2, 2)))

    # --- Small benchmark shape (M = 60) -> fused single-kernel fast path -----
    N, C_in, H, W = 2, 1, 16, 16
    x = jax.random.normal(k_x, (N, C_in, H, W, 2), dtype=jnp.float32)
    out = jax.block_until_ready(fwd(x, params))
    assert out.shape == (2, 45, 5, 6, 2), out.shape
    assert bool(jnp.all(jnp.isfinite(out)))
    ref = _reference_forward(x, params)
    max_err = float(jnp.max(jnp.abs(out - ref)))
    assert max_err < 5e-2, f"fast path: max abs error vs f32 reference: {max_err}"

    # --- Larger shape (M = 1740) -> exercises the tiled two-pass path --------
    x2 = jax.random.normal(k_x2, (2, 1, 64, 64, 2), dtype=jnp.float32)
    out2 = jax.block_until_ready(fwd(x2, params))
    assert out2.shape == (2, 45, 29, 30, 2), out2.shape
    assert bool(jnp.all(jnp.isfinite(out2)))
    ref2 = _reference_forward(x2, params)
    max_err2 = float(jnp.max(jnp.abs(out2 - ref2)))
    assert max_err2 < 5e-2, f"tiled path: max abs error vs f32 reference: {max_err2}"

    print("KERNEL_OK")
</pallas_src>

<mosaic_0001>
module attributes {stable_mosaic.version = 11 : i64} {
  func.func @_fused_kernel(%arg0: i32, %arg1: memref<64x128xbf16, #tpu.memory_space<vmem>>, %arg2: memref<128x128xbf16, #tpu.memory_space<vmem>>, %arg3: memref<64x128xf32, #tpu.memory_space<vmem>>) attributes {dimension_semantics = [#tpu.dimension_semantics<arbitrary>], iteration_bounds = array<i64: 1>, scalar_prefetch = 0 : i64, scratch_operands = 0 : i64, tpu.core_type = #tpu.core_type<tc>, window_params = [{pipeline_mode = #tpu.pipeline_mode<synchronous>, transform_indices = @transform_0, window_bounds = array<i64: 64, 128>}, {pipeline_mode = #tpu.pipeline_mode<synchronous>, transform_indices = @transform_1, window_bounds = array<i64: 128, 128>}, {pipeline_mode = #tpu.pipeline_mode<synchronous>, transform_indices = @transform_2, window_bounds = array<i64: 64, 128>}]} {
    %c0 = arith.constant 0 : index
    %c0_0 = arith.constant 0 : index
    %0 = vector.load %arg1[%c0, %c0_0] : memref<64x128xbf16, #tpu.memory_space<vmem>>, vector<64x128xbf16>
    %c0_1 = arith.constant 0 : index
    %c0_2 = arith.constant 0 : index
    %1 = vector.load %arg2[%c0_1, %c0_2] : memref<128x128xbf16, #tpu.memory_space<vmem>>, vector<128x128xbf16>
    %cst = arith.constant dense<0.000000e+00> : vector<64x128xf32>
    %2 = tpu.matmul %0, %1, %cst {dimension_numbers = #tpu.dot_dimension_numbers<[1], [0], [0], [1], [0, 0, 1, 1], [], []>} : vector<64x128xbf16>, vector<128x128xbf16>, vector<64x128xf32> -> vector<64x128xf32>
    %cst_3 = arith.constant dense<0.000000e+00> : vector<128xf32>
    %3 = vector.multi_reduction <add>, %2, %cst_3 [0] : vector<64x128xf32> to vector<128xf32>
    %4 = vector.shape_cast %3 : vector<128xf32> to vector<1x128xf32>
    %5 = arith.mulf %2, %2 : vector<64x128xf32>
    %cst_4 = arith.constant dense<0.000000e+00> : vector<128xf32>
    %6 = vector.multi_reduction <add>, %5, %cst_4 [0] : vector<64x128xf32> to vector<128xf32>
    %7 = vector.shape_cast %6 : vector<128xf32> to vector<1x128xf32>
    %cst_5 = arith.constant 0.0166666675 : f32
    %8 = vector.broadcast %cst_5 : f32 to vector<1x128xf32>
    %9 = arith.mulf %4, %8 : vector<1x128xf32>
    %cst_6 = arith.constant 0.0166666675 : f32
    %10 = vector.broadcast %cst_6 : f32 to vector<1x128xf32>
    %11 = arith.mulf %7, %10 : vector<1x128xf32>
    %12 = arith.mulf %9, %9 : vector<1x128xf32>
    %13 = arith.subf %11, %12 : vector<1x128xf32>
    %cst_7 = arith.constant 0.000000e+00 : f32
    %14 = vector.broadcast %cst_7 : f32 to vector<1x128xf32>
    %15 = arith.maximumf %13, %14 : vector<1x128xf32>
    %cst_8 = arith.constant 9.99999974E-6 : f32
    %16 = vector.broadcast %cst_8 : f32 to vector<1x128xf32>
    %17 = arith.addf %15, %16 : vector<1x128xf32>
    %18 = math.rsqrt %17 : vector<1x128xf32>
    %19 = vector.broadcast %9 : vector<1x128xf32> to vector<64x128xf32>
    %20 = arith.subf %2, %19 : vector<64x128xf32>
    %21 = vector.broadcast %18 : vector<1x128xf32> to vector<64x128xf32>
    %22 = arith.mulf %20, %21 : vector<64x128xf32>
    %cst_9 = arith.constant 0.000000e+00 : f32
    %23 = vector.broadcast %cst_9 : f32 to vector<64x128xf32>
    %24 = arith.cmpf oge, %22, %23 : vector<64x128xf32>
    %cst_10 = arith.constant 0.00999999977 : f32
    %25 = vector.broadcast %cst_10 : f32 to vector<64x128xf32>
    %26 = arith.mulf %25, %22 : vector<64x128xf32>
    %27 = arith.select %24, %22, %26 : vector<64x128xi1>, vector<64x128xf32>
    %c0_11 = arith.constant 0 : index
    %c0_12 = arith.constant 0 : index
    %28 = vector.load %arg3[%c0_11, %c0_12] : memref<64x128xf32, #tpu.memory_space<vmem>>, vector<64x128xf32>
    tpu.vector_store %arg3[%c0_11, %c0_12], %27 {strides = array<i32>} : memref<64x128xf32, #tpu.memory_space<vmem>>, vector<64x128xf32>,
    return
  }
  func.func @transform_0(%arg0: i32) -> (i32, i32) {
    %c0_i32 = arith.constant 0 : i32
    %c0_i32_0 = arith.constant 0 : i32
    %c0_i32_1 = arith.constant 0 : i32
    return %c0_i32, %c0_i32_0 : i32, i32
  }
  func.func @transform_1(%arg0: i32) -> (i32, i32) {
    %c0_i32 = arith.constant 0 : i32
    %c0_i32_0 = arith.constant 0 : i32
    %c0_i32_1 = arith.constant 0 : i32
    return %c0_i32, %c0_i32_0 : i32, i32
  }
  func.func @transform_2(%arg0: i32) -> (i32, i32) {
    %c0_i32 = arith.constant 0 : i32
    %c0_i32_0 = arith.constant 0 : i32
    %c0_i32_1 = arith.constant 0 : i32
    return %c0_i32, %c0_i32_0 : i32, i32
  }
}

</mosaic_0001>

<llo_original>
// kernel: encoder_forward.1
$region0: #{encoder_forward.1}
  #allocation0 [shape = 'u32[]', space=smem, size = 0x4, offset = 0x4, fixed_abs, tag = 'smem constant byte address 0x4 - core index']
  #allocation1 [shape = 'u32[72,128]{1,0:T(1,128)}', space=vmem, size = 0x9000, scoped, tag = 'internal scratch']
  %s0 = inlined_call_operand.vmem [shape: bf16[64,128], index: 0, kind: input, shape index: {}]
  %s1 = inlined_call_operand.vmem [shape: bf16[128,128], index: 1, kind: input, shape index: {}]
  %s2 = inlined_call_operand.vmem [shape: f32[64,128], index: 2, kind: output, shape index: {}]
  %s3 = sld [smem:[#allocation0]]
  $region18: #{encoder_forward.1} parent=0
    _
  %s5 = ssub.s32 1, %s3
  %s6 = scalar_select 0, %s5, %s3
  // Predicated region
  $region2: #{encoder_forward.1} parent=0 // pred_check
    _
  $region3: #{encoder_forward.1} parent=0 // pred_check_branch
    %8 = sbr.rel (0) target = $region5
  $region4: #{encoder_forward.1} parent=0 // pred_region
    _
  $region5: #{encoder_forward.1} parent=0 // pred_fallthru
    _
  // Predicated region
  $region6: #{encoder_forward.1} parent=0 // pred_check
    _
  $region7: #{encoder_forward.1} parent=0 // pred_check_branch
    %10 = sbr.rel (0) target = $region9
  $region8: #{encoder_forward.1} parent=0 // pred_region
    _
  $region9: #{encoder_forward.1} parent=0 // pred_fallthru
    _
  %v11 = vld [vmem:[%s0] sm:$0xf]
  %v12 = vld [vmem:[%s0 + $0x4] sm:$0xf]
  %v13 = vld [vmem:[%s0 + $0x8] sm:$0xf]
  %v14 = vld [vmem:[%s0 + $0xc] sm:$0xf]
  %v15 = vld [vmem:[%s0 + $0x10] sm:$0xf]
  %v16 = vld [vmem:[%s0 + $0x14] sm:$0xf]
  %v17 = vld [vmem:[%s0 + $0x18] sm:$0xf]
  %v18 = vld [vmem:[%s0 + $0x1c] sm:$0xf]
  %v19 = vld [vmem:[%s1] sm:$0xf]
  %v20 = vld [vmem:[%s1 + $0x4] sm:$0xf]
  %v21 = vld [vmem:[%s1 + $0x8] sm:$0xf]
  %v22 = vld [vmem:[%s1 + $0xc] sm:$0xf]
  %v23 = vld [vmem:[%s1 + $0x10] sm:$0xf]
  %v24 = vld [vmem:[%s1 + $0x14] sm:$0xf]
  %v25 = vld [vmem:[%s1 + $0x18] sm:$0xf]
  %v26 = vld [vmem:[%s1 + $0x1c] sm:$0xf]
  %v27 = vld [vmem:[%s1 + $0x20] sm:$0xf]
  %v28 = vld [vmem:[%s1 + $0x24] sm:$0xf]
  %v29 = vld [vmem:[%s1 + $0x28] sm:$0xf]
  %v30 = vld [vmem:[%s1 + $0x2c] sm:$0xf]
  %v31 = vld [vmem:[%s1 + $0x30] sm:$0xf]
  %v32 = vld [vmem:[%s1 + $0x34] sm:$0xf]
  %v33 = vld [vmem:[%s1 + $0x38] sm:$0xf]
  %v34 = vld [vmem:[%s1 + $0x3c] sm:$0xf]
  %v43 = vunpack.c.l.b16 %v11
  %v44 = vunpack.c.l.b16 %v12
  %v45 = vunpack.c.l.b16 %v13
  %v46 = vunpack.c.l.b16 %v14
  %v47 = vunpack.c.l.b16 %v15
  %v48 = vunpack.c.l.b16 %v16
  %v49 = vunpack.c.l.b16 %v17
  %v50 = vunpack.c.l.b16 %v18
  %v51 = vpack.c.b16 %v44, %v43
  %v52 = vpack.c.b16 %v46, %v45
  %v53 = vpack.c.b16 %v48, %v47
  %v54 = vpack.c.b16 %v50, %v49
  %v75 = vunpack.c.l.b16 %v19
  %v76 = vunpack.c.l.b16 %v20
  %v77 = vunpack.c.l.b16 %v21
  %v78 = vunpack.c.l.b16 %v22
  %v79 = vunpack.c.l.b16 %v23
  %v80 = vunpack.c.l.b16 %v24
  %v81 = vunpack.c.l.b16 %v25
  %v82 = vunpack.c.l.b16 %v26
  %v83 = vunpack.c.l.b16 %v27
  %v84 = vunpack.c.l.b16 %v28
  %v85 = vunpack.c.l.b16 %v29
  %v86 = vunpack.c.l.b16 %v30
  %v87 = vunpack.c.l.b16 %v31
  %v88 = vunpack.c.l.b16 %v32
  %v89 = vunpack.c.l.b16 %v33
  %v90 = vunpack.c.l.b16 %v34
  %v91 = vpack.c.b16 %v76, %v75
  %v92 = vpack.c.b16 %v78, %v77
  %v93 = vpack.c.b16 %v80, %v79
  %v94 = vpack.c.b16 %v82, %v81
  %v95 = vpack.c.b16 %v84, %v83
  %v96 = vpack.c.b16 %v86, %v85
  %v97 = vpack.c.b16 %v88, %v87
  %v98 = vpack.c.b16 %v90, %v89
  %107 = vmatpush.bf16.msra.mxu0 %v98
  %108 = vmatpush.bf16.msra.mxu0 %v97
  %109 = vmatpush.bf16.msra.mxu0 %v96
  %110 = vmatpush.bf16.msra.mxu0 %v95
  %111 = vmatpush.bf16.msra.mxu0 %v94
  %112 = vmatpush.bf16.msra.mxu0 %v93
  %113 = vmatpush.bf16.msra.mxu0 %v92
  %114 = vmatpush.bf16.msra.mxu0 %v91
  %115 = vmatmul.bf16.gmra.mxu0 %v51
  %v116 = vpop.f32.mrf.mxu0
  %v117 = vadd.f32 0.0, %v116
  %v118 = vpop.f32.mrf.mxu0
  %v119 = vadd.f32 0.0, %v118
  %120 = vmatmul.bf16.gmra.mxu0 %v52
  %v121 = vpop.f32.mrf.mxu0
  %v122 = vadd.f32 0.0, %v121
  %v123 = vpop.f32.mrf.mxu0
  %v124 = vadd.f32 0.0, %v123
  %125 = vmatmul.bf16.gmra.mxu0 %v53
  %v126 = vpop.f32.mrf.mxu0
  %v127 = vadd.f32 0.0, %v126
  %v128 = vpop.f32.mrf.mxu0
  %v129 = vadd.f32 0.0, %v128
  %130 = vmatmul.bf16.gmra.mxu0 %v54
  %v131 = vpop.f32.mrf.mxu0
  %v132 = vadd.f32 0.0, %v131
  %v133 = vpop.f32.mrf.mxu0
  %v134 = vadd.f32 0.0, %v133
  %135 = vdwg.mxu0
  %v136 = vadd.f32 %v117, %v119
  %v137 = vadd.f32 %v136, %v122
  %v138 = vadd.f32 %v137, %v124
  %v139 = vadd.f32 %v138, %v127
  %v140 = vadd.f32 %v139, %v129
  %v141 = vadd.f32 %v140, %v132
  %v142 = vadd.f32 %v141, %v134
  %v143 = vrot.slane %v142, 4
  %v144 = vadd.f32 %v142, %v143
  %v145 = vrot.slane %v144, 2
  %v146 = vadd.f32 %v144, %v145
  %v147 = vrot.slane %v146, 1
  %v148 = vadd.f32 %v146, %v147
  %v149 = vmul.f32 %v117, %v117
  %v150 = vmul.f32 %v119, %v119
  %v151 = vmul.f32 %v122, %v122
  %v152 = vmul.f32 %v124, %v124
  %v153 = vmul.f32 %v127, %v127
  %v154 = vmul.f32 %v129, %v129
  %v155 = vmul.f32 %v132, %v132
  %v156 = vmul.f32 %v134, %v134
  %v157 = vadd.f32 %v149, %v150
  %v158 = vadd.f32 %v157, %v151
  %v159 = vadd.f32 %v158, %v152
  %v160 = vadd.f32 %v159, %v153
  %v161 = vadd.f32 %v160, %v154
  %v162 = vadd.f32 %v161, %v155
  %v163 = vadd.f32 %v162, %v156
  %v164 = vrot.slane %v163, 4
  %v165 = vadd.f32 %v163, %v164
  %v166 = vrot.slane %v165, 2
  %v167 = vadd.f32 %v165, %v166
  %v168 = vrot.slane %v167, 1
  %v169 = vadd.f32 %v167, %v168
  %v170 = vmul.f32 %v148, 0.016666668
  %v171 = vmul.f32 %v169, 0.016666668
  %v172 = vmul.f32 %v170, %v170
  %v173 = vsub.f32 %v171, %v172
  %v174 = vmax.f32 %v173, 0.0
  %v175 = vadd.f32 %v174, 1e-05
  %v176 = vrsqrt.pop %v175
  %v177 = vmul.f32 %v176, %v175
  %v178 = vmul.f32 %v177, %v176
  %v179 = vmul.f32 0.5, %v178
  %v180 = vsub.f32 1.5, %v179
  %v181 = vmul.f32 %v176, %v180
  %vm182 = vweird.f32 %v175
  %vm183 = vweird.f32 %v176
  %vm184 = vmor %vm182, %vm183
  %v185 = vsel %vm184, %v176, %v181
  %v186 = vsub.f32 %v117, %v170
  %v187 = vsub.f32 %v119, %v170
  %v188 = vsub.f32 %v122, %v170
  %v189 = vsub.f32 %v124, %v170
  %v190 = vsub.f32 %v127, %v170
  %v191 = vsub.f32 %v129, %v170
  %v192 = vsub.f32 %v132, %v170
  %v193 = vsub.f32 %v134, %v170
  %v194 = vmul.f32 %v186, %v185
  %v195 = vmul.f32 %v187, %v185
  %v196 = vmul.f32 %v188, %v185
  %v197 = vmul.f32 %v189, %v185
  %v198 = vmul.f32 %v190, %v185
  %v199 = vmul.f32 %v191, %v185
  %v200 = vmul.f32 %v192, %v185
  %v201 = vmul.f32 %v193, %v185
  %vm202 = vcmp.ge.f32.partialorder %v194, 0.0
  %vm203 = vcmp.ge.f32.partialorder %v195, 0.0
  %vm204 = vcmp.ge.f32.partialorder %v196, 0.0
  %vm205 = vcmp.ge.f32.partialorder %v197, 0.0
  %vm206 = vcmp.ge.f32.partialorder %v198, 0.0
  %vm207 = vcmp.ge.f32.partialorder %v199, 0.0
  %vm208 = vcmp.ge.f32.partialorder %v200, 0.0
  %vm209 = vcmp.ge.f32.partialorder %v201, 0.0
  %v210 = vmul.f32 %v194, 0.01
  %v211 = vmul.f32 %v195, 0.01
  %v212 = vmul.f32 %v196, 0.01
  %v213 = vmul.f32 %v197, 0.01
  %v214 = vmul.f32 %v198, 0.01
  %v215 = vmul.f32 %v199, 0.01
  %v216 = vmul.f32 %v200, 0.01
  %v217 = vmul.f32 %v201, 0.01
  %v218 = vsel %vm202, %v194, %v210
  %v219 = vsel %vm203, %v195, %v211
  %v220 = vsel %vm204, %v196, %v212
  %v221 = vsel %vm205, %v197, %v213
  %v222 = vsel %vm206, %v198, %v214
  %v223 = vsel %vm207, %v199, %v215
  %v224 = vsel %vm208, %v200, %v216
  %v225 = vsel %vm209, %v201, %v217
  %226 = vst [vmem:[%s2] sm:$0xff] %v218
  %227 = vst [vmem:[%s2 + $0x8] sm:$0xff] %v219
  %228 = vst [vmem:[%s2 + $0x10] sm:$0xff] %v220
  %229 = vst [vmem:[%s2 + $0x18] sm:$0xff] %v221
  %230 = vst [vmem:[%s2 + $0x20] sm:$0xff] %v222
  %231 = vst [vmem:[%s2 + $0x28] sm:$0xff] %v223
  %232 = vst [vmem:[%s2 + $0x30] sm:$0xff] %v224
  %233 = vst [vmem:[%s2 + $0x38] sm:$0xff] %v225
  // Predicated region
  $region10: #{encoder_forward.1} parent=0 // pred_check
    _
  $region11: #{encoder_forward.1} parent=0 // pred_check_branch
    %235 = sbr.rel (0) target = $region13
  $region12: #{encoder_forward.1} parent=0 // pred_region
    _
  $region13: #{encoder_forward.1} parent=0 // pred_fallthru
    _
  // Predicated region
  $region14: #{encoder_forward.1} parent=0 // pred_check
    _
  $region15: #{encoder_forward.1} parent=0 // pred_check_branch
    %237 = sbr.rel (0) target = $region17
  $region16: #{encoder_forward.1} parent=0 // pred_region
    _
  $region17: #{encoder_forward.1} parent=0 // pred_fallthru
    _

</llo_original>
